<compile_context>
chip_gen: v7x
topology: tpu7x:2x2x1
jax: 0.10.0
libtpu: 0.0.40
codegen_flags: <defaults>
</compile_context>

<pallas_src>
import jax
import jax.numpy as jnp
from jax.experimental import pallas as pl
from jax.experimental.pallas import tpu as pltpu


def _sa_mhead_kernel(s_ref, tv_ref, tq_ref, o_ref):
    # s_ref : (TILE_R, 1) or (1, TILE_C)   folded per-channel scale v*k*q
    # tv_ref: (TILE_R, TILE_C)             tensorv tile
    # tq_ref: (TILE_R, TILE_C)             tensorq tile
    tv = tv_ref[...]
    o_ref[...] = (s_ref[...] * (tv * tv * tq_ref[...])).astype(o_ref.dtype)


def _pick_tiles(rows, cols, itemsize, target_bytes):
    """Pick (tile_rows, tile_cols): ~target_bytes per stream, lane-dense, dtype-packed."""
    # Native packed sublane tile: 8 rows for f32, 16 for bf16, 32 for int8/fp8.
    sub_mult = 8 * max(1, 4 // max(1, itemsize))
    target_elems = max(sub_mult * 128, target_bytes // max(1, itemsize))

    lane_cap = 8192
    if cols <= lane_cap:
        tile_cols = cols  # full dim is always a legal block shape
    else:
        # Balance the lane split instead of (cap + small masked remainder).
        n_j = pl.cdiv(cols, lane_cap)
        tile_cols = min(lane_cap, ((pl.cdiv(cols, n_j) + 127) // 128) * 128)

    rows_budget = max(sub_mult, target_elems // max(1, tile_cols))
    if rows <= rows_budget:
        tile_rows = rows  # full dim is always a legal block shape
    else:
        tile_rows = max(sub_mult, (rows_budget // sub_mult) * sub_mult)
    return tile_rows, tile_cols


def self_attention_mhead_forward(tensorv, tensorq, v_w, k_w, q_w,
                                 *, target_block_bytes=4 << 20,
                                 min_pallas_bytes=1 << 20,
                                 force_pallas=False):
    """tensorv, tensorq: (B, C, H, W) NCHW.  v_w/k_w/q_w: (C,) per-channel scales."""
    B, C, H, W = tensorv.shape
    assert tensorq.shape == tensorv.shape
    BC, HW = B * C, H * W
    dtype = tensorv.dtype
    itemsize = jnp.dtype(dtype).itemsize

    # Fold the three scales once (a (C,)-sized op).
    s = (v_w.astype(jnp.float32) * k_w.astype(jnp.float32)
         * q_w.astype(jnp.float32)).astype(dtype)

    # Tiny-problem fast path: launch + pipeline prologue would dominate.
    if (not force_pallas) and BC * HW * itemsize < min_pallas_bytes:
        sb = s[None, :, None, None]
        return sb * (tensorv * tensorv * tensorq)

    if HW >= 128:
        # Layout A: sublane = B*C, lane = H*W (lane-dense when HW >= 128).
        rows, cols = BC, HW
        tv2 = tensorv.reshape(rows, cols)
        tq2 = tensorq.reshape(rows, cols)
        s2 = jnp.broadcast_to(s[None, :], (B, C)).reshape(rows, 1)
        scale_shape_fn = lambda tr, tc: (tr, 1)
        scale_map = lambda i, j: (i, 0)
    else:
        # Layout B: sublane = B, lane = C*H*W. Keeps the output last dim >= 128
        # when the spatial extent is tiny, so stores stay unmasked.
        rows, cols = B, C * HW
        tv2 = tensorv.reshape(rows, cols)
        tq2 = tensorq.reshape(rows, cols)
        s2 = jnp.broadcast_to(s[:, None], (C, HW)).reshape(1, cols)
        scale_shape_fn = lambda tr, tc: (1, tc)
        scale_map = lambda i, j: (0, j)

    tile_rows, tile_cols = _pick_tiles(rows, cols, itemsize, target_block_bytes)
    grid = (pl.cdiv(rows, tile_rows), pl.cdiv(cols, tile_cols))

    scale_spec = pl.BlockSpec(scale_shape_fn(tile_rows, tile_cols), scale_map)
    mat_spec = pl.BlockSpec((tile_rows, tile_cols), lambda i, j: (i, j))

    out2 = pl.pallas_call(
        _sa_mhead_kernel,
        out_shape=jax.ShapeDtypeStruct((rows, cols), dtype),
        grid_spec=pl.GridSpec(
            grid=grid,
            in_specs=[scale_spec, mat_spec, mat_spec],
            out_specs=mat_spec,
        ),
        compiler_params=pltpu.CompilerParams(
            dimension_semantics=("parallel", "parallel"),
            # 24 MiB double-buffered footprint at 4 MiB blocks; 32 MiB scoped
            # fits v5e/v6e (128 MiB physical) and v7x (64 MiB physical).
            vmem_limit_bytes=32 << 20,
        ),
    )(s2, tv2, tq2)

    return out2.reshape(B, C, H, W)


def _reference(tensorv, tensorq, v_w, k_w, q_w):
    # Pure-JAX reference in the original association order.
    vb = v_w[None, :, None, None]
    kb = k_w[None, :, None, None]
    qb = q_w[None, :, None, None]
    return (vb * tensorv) * ((kb * tensorv) * (qb * tensorq))


if __name__ == "__main__":
    key = jax.random.PRNGKey(0)
    kv, kq, kw = jax.random.split(key, 3)

    # TODO(synk): the original module's `nn.linear()` / `self.linear()` calls
    # are non-runnable; v/k/q are modeled as deterministic per-channel scale
    # vectors of shape (inchannel,) standing in for that projection's output.

    # Case 1: H*W >= 128  -> layout A ((B*C, H*W)).
    B, C, H, W = 2, 4, 16, 16
    tensorv = jax.random.normal(kv, (B, C, H, W), dtype=jnp.float32)
    tensorq = jax.random.normal(kq, (B, C, H, W), dtype=jnp.float32)
    wvkq = jax.random.normal(kw, (3, C), dtype=jnp.float32)
    v_w, k_w, q_w = wvkq[0], wvkq[1], wvkq[2]

    out = self_attention_mhead_forward(tensorv, tensorq, v_w, k_w, q_w,
                                       force_pallas=True)
    out = jax.block_until_ready(out)
    ref = _reference(tensorv, tensorq, v_w, k_w, q_w)
    assert out.shape == (B, C, H, W)
    assert jnp.allclose(out, ref, atol=1e-5, rtol=1e-5)

    # Case 2: H*W < 128 -> lane-dense fallback layout B ((B, C*H*W)).
    B2, C2, H2, W2 = 2, 4, 8, 8
    tv_s = jax.random.normal(kv, (B2, C2, H2, W2), dtype=jnp.float32)
    tq_s = jax.random.normal(kq, (B2, C2, H2, W2), dtype=jnp.float32)
    out_s = self_attention_mhead_forward(tv_s, tq_s, v_w, k_w, q_w,
                                         force_pallas=True)
    out_s = jax.block_until_ready(out_s)
    ref_s = _reference(tv_s, tq_s, v_w, k_w, q_w)
    assert out_s.shape == (B2, C2, H2, W2)
    assert jnp.allclose(out_s, ref_s, atol=1e-5, rtol=1e-5)

    print("KERNEL_OK")
</pallas_src>

<mosaic_0001>
module attributes {stable_mosaic.version = 11 : i64} {
  func.func @_sa_mhead_kernel(%arg0: i32, %arg1: i32, %arg2: memref<8x1xf32, #tpu.memory_space<vmem>>, %arg3: memref<8x256xf32, #tpu.memory_space<vmem>>, %arg4: memref<8x256xf32, #tpu.memory_space<vmem>>, %arg5: memref<8x256xf32, #tpu.memory_space<vmem>>) attributes {dimension_semantics = [#tpu.dimension_semantics<parallel>, #tpu.dimension_semantics<parallel>], iteration_bounds = array<i64: 1, 1>, scalar_prefetch = 0 : i64, scratch_operands = 0 : i64, tpu.core_type = #tpu.core_type<tc>, window_params = [{transform_indices = @transform_0, window_bounds = array<i64: 8, 1>}, {transform_indices = @transform_1, window_bounds = array<i64: 8, 256>}, {transform_indices = @transform_2, window_bounds = array<i64: 8, 256>}, {transform_indices = @transform_3, window_bounds = array<i64: 8, 256>}]} {
    %c0 = arith.constant 0 : index
    %c0_0 = arith.constant 0 : index
    %0 = vector.load %arg3[%c0, %c0_0] : memref<8x256xf32, #tpu.memory_space<vmem>>, vector<8x256xf32>
    %c0_1 = arith.constant 0 : index
    %c0_2 = arith.constant 0 : index
    %1 = vector.load %arg2[%c0_1, %c0_2] : memref<8x1xf32, #tpu.memory_space<vmem>>, vector<8x1xf32>
    %2 = arith.mulf %0, %0 : vector<8x256xf32>
    %c0_3 = arith.constant 0 : index
    %c0_4 = arith.constant 0 : index
    %3 = vector.load %arg4[%c0_3, %c0_4] : memref<8x256xf32, #tpu.memory_space<vmem>>, vector<8x256xf32>
    %4 = arith.mulf %2, %3 : vector<8x256xf32>
    %5 = vector.broadcast %1 : vector<8x1xf32> to vector<8x256xf32>
    %6 = arith.mulf %5, %4 : vector<8x256xf32>
    %c0_5 = arith.constant 0 : index
    %c0_6 = arith.constant 0 : index
    %7 = vector.load %arg5[%c0_5, %c0_6] : memref<8x256xf32, #tpu.memory_space<vmem>>, vector<8x256xf32>
    tpu.vector_store %arg5[%c0_5, %c0_6], %6 {strides = array<i32>} : memref<8x256xf32, #tpu.memory_space<vmem>>, vector<8x256xf32>,
    return
  }
  func.func @transform_0(%arg0: i32, %arg1: i32) -> (i32, i32) {
    %c0_i32 = arith.constant 0 : i32
    %c0_i32_0 = arith.constant 0 : i32
    return %arg0, %c0_i32 : i32, i32
  }
  func.func @transform_1(%arg0: i32, %arg1: i32) -> (i32, i32) {
    %c0_i32 = arith.constant 0 : i32
    return %arg0, %arg1 : i32, i32
  }
  func.func @transform_2(%arg0: i32, %arg1: i32) -> (i32, i32) {
    %c0_i32 = arith.constant 0 : i32
    return %arg0, %arg1 : i32, i32
  }
  func.func @transform_3(%arg0: i32, %arg1: i32) -> (i32, i32) {
    %c0_i32 = arith.constant 0 : i32
    return %arg0, %arg1 : i32, i32
  }
}

</mosaic_0001>

<llo_original>
// kernel: tpu_custom_call.1
$region0: #{tpu_custom_call.1}
  #allocation0 [shape = 'u32[]', space=smem, size = 0x4, offset = 0x4, fixed_abs, tag = 'smem constant byte address 0x4 - core index']
  #allocation1 [shape = 'u32[144,128]{1,0:T(1,128)}', space=vmem, size = 0x12000, scoped, tag = 'internal scratch']
  %s0 = inlined_call_operand.vmem [shape: f32[8,1], index: 0, kind: input, shape index: {}]
  %s1 = inlined_call_operand.hbm [shape: f32[8,256], index: 1, kind: input, shape index: {}]
  %s2 = inlined_call_operand.vmem [shape: f32[8,256], index: 2, kind: input, shape index: {}]
  %s3 = inlined_call_operand.hbm [shape: f32[8,256], index: 3, kind: output, shape index: {}]
  %s4 = sld [smem:[#allocation0]]
  $region26: #{tpu_custom_call.1} parent=0
    _
  %s6 = ssub.s32 1, %s4
  %s7 = scalar_select 0, %s6, %s4
  $region1: #{tpu_custom_call.1} parent=0
    #allocation2 [shape = 'u8[8192]{0}', space=vmem, size = 0x2000, scoped, tag = 'input window, operand 1, single buffered']
    #allocation3 [shape = 's32[1]{0}', space=sflag, size = 0x4, scoped, tag = 'scoped memory for tpu_custom_call.1']
    #allocation4 [shape = 's32[1]{0}', space=sflag, size = 0x4, scoped, tag = 'scoped memory for tpu_custom_call.1']
    #allocation5 [shape = 'u8[8192]{0}', space=vmem, size = 0x2000, scoped, tag = 'output window, operand 0, single buffered']
    %8 = vsyncpa [#allocation3], 0
    %9 = vsyncpa [#allocation4], 0
    // Predicated region
    $region2: #{tpu_custom_call.1} parent=1 // pred_check
      _
    $region3: #{tpu_custom_call.1} parent=1 // pred_check_branch
      %11 = sbr.rel (0) target = $region5
    $region4: #{tpu_custom_call.1} parent=1 // pred_region
      _
    $region5: #{tpu_custom_call.1} parent=1 // pred_fallthru
      _
    // Predicated region
    $region6: #{tpu_custom_call.1} parent=1 // pred_check
      _
    $region7: #{tpu_custom_call.1} parent=1 // pred_check_branch
      %13 = sbr.rel (0) target = $region9
    $region8: #{tpu_custom_call.1} parent=1 // pred_region
      %s15 = ssub.s32 256, 256
      %16 = vsyncadd [#allocation3], %s15
      %s18 = sshll.u32 [#allocation2], 4
      %s19 = int_to_ptr.vmem [resolvable:$true] %s18
      %21 = dma.hbm_to_vmem [thread:$0]  %s1, 256, %s19, [#allocation3]
    $region9: #{tpu_custom_call.1} parent=1 // pred_fallthru
      _
    // Predicated region
    $region10: #{tpu_custom_call.1} parent=1 // pred_check
      _
    $region11: #{tpu_custom_call.1} parent=1 // pred_check_branch
      %23 = sbr.rel (0) target = $region13
    $region12: #{tpu_custom_call.1} parent=1 // pred_region
      _
    $region13: #{tpu_custom_call.1} parent=1 // pred_fallthru
      _
    // Predicated region
    $region14: #{tpu_custom_call.1} parent=1 // pred_check
      _
    $region15: #{tpu_custom_call.1} parent=1 // pred_check_branch
      %25 = sbr.rel (0) target = $region17
    $region16: #{tpu_custom_call.1} parent=1 // pred_region
      %26 = dma.done [#allocation3], 256
    $region17: #{tpu_custom_call.1} parent=1 // pred_fallthru
      _
    %v27 = vld [vmem:[#allocation2] sm:$0xff]
    %v28 = vld [vmem:[#allocation2 + $0x8] sm:$0xff]
    %v29 = vld [vmem:[%s0] sm:$0xff]
    %v30 = vmul.f32 %v27, %v27
    %v31 = vmul.f32 %v28, %v28
    %v32 = vld [vmem:[%s2] sm:$0xff]
    %v33 = vld [vmem:[%s2 + $0x8] sm:$0xff]
    %v34 = vmul.f32 %v30, %v32
    %v35 = vmul.f32 %v31, %v33
    %37 = vset.pattern.permute.xlu0 0
    %38 = vperm.xlu0 %37, %v29
    %v39 = vpop.permute.xlu0 %38
    %v41 = vmul.f32 %v39, %v34
    %v42 = vmul.f32 %v39, %v35
    %43 = vst [vmem:[#allocation5] sm:$0xff] %v41
    %44 = vst [vmem:[#allocation5 + $0x8] sm:$0xff] %v42
    // Predicated region
    $region18: #{tpu_custom_call.1} parent=1 // pred_check
      _
    $region19: #{tpu_custom_call.1} parent=1 // pred_check_branch
      %46 = sbr.rel (0) target = $region21
    $region20: #{tpu_custom_call.1} parent=1 // pred_region
      %s48 = ssub.s32 256, 256
      %49 = vsyncadd [#allocation4], %s48
      %s51 = sshll.u32 [#allocation5], 4
      %s52 = int_to_ptr.vmem [resolvable:$true] %s51
      %54 = dma.vmem_to_hbm [thread:$0]  %s52, 256, %s3, [#allocation4]
    $region21: #{tpu_custom_call.1} parent=1 // pred_fallthru
      _
    // Predicated region
    $region22: #{tpu_custom_call.1} parent=1 // pred_check
      _
    $region23: #{tpu_custom_call.1} parent=1 // pred_check_branch
      %56 = sbr.rel (0) target = $region25
    $region24: #{tpu_custom_call.1} parent=1 // pred_region
      %57 = dma.done [#allocation4], 256
    $region25: #{tpu_custom_call.1} parent=1 // pred_fallthru
      _
    %58 = vsyncpa [#allocation3], 1
    %59 = vsyncpa [#allocation4], 1

</llo_original>
